<compile_context>
chip_gen: v5e
topology: v5e:2x2
jax: 0.10.0
libtpu: 0.0.40
codegen_flags: <defaults>
</compile_context>

<pallas_src>
import functools

import jax
import jax.numpy as jnp
import numpy as np
from jax.experimental import pallas as pl
from jax.experimental.pallas import tpu as pltpu

_LANES = 128          # vreg lane width
_MIN_ROWS = 32        # minimum sublane tile legal for f32 / bf16 / int8 blocks


def _round_up(x, m):
    return ((x + m - 1) // m) * m


def _chip_defaults():
    """(num_partials, block_rows, vmem_limit_bytes) tuned per TPU generation."""
    try:
        kind = jax.devices()[0].device_kind.lower()
    except Exception:
        kind = ""
    if "7" in kind:                       # v7x: 2 TCs, 64 MiB VMEM, ~3.2 TB/s HBM
        return 2, 16384, 48 * 1024 * 1024
    if "v6" in kind:                      # v6e: 1 TC, 128 MiB physical VMEM
        return 1, 8192, 64 * 1024 * 1024
    if "v5p" in kind or "v4" in kind:     # megacore: 2 TensorCores per device
        return 2, 8192, 48 * 1024 * 1024
    if "v5" in kind:                      # v5e: default scoped VMEM is only 16 MiB
        return 1, 8192, 32 * 1024 * 1024
    return 1, 8192, 32 * 1024 * 1024      # unknown chip: conservative, safe everywhere


def _double_loss_kernel(pred_ref, target_ref, recon_ref, input_ref, out_ref,
                        acc_ref, *, lambd, inv_n_bce, inv_n_mse, rows, tm, tiles):
    p = pl.program_id(0)
    t = pl.program_id(1)
    last_t = pl.num_programs(1) - 1

    # Start of this partial's stream: zero the vreg accumulator and the output.
    @pl.when(t == 0)
    def _init():
        acc_ref[...] = jnp.zeros_like(acc_ref)
        out_ref[0, 0] = jnp.float32(0.0)

    # Tiny BCE head: computed once, on the FIRST step of partial 0, so the
    # log/clamp work overlaps the MSE stream instead of trailing the last DMA.
    @pl.when(jnp.logical_and(p == 0, t == 0))
    def _bce():
        pr = pred_ref[...].astype(jnp.float32)
        tg = target_ref[...].astype(jnp.float32)
        # torch.nn.BCELoss clamps the log terms at -100 for numerical stability.
        log_p = jnp.maximum(jnp.log(pr), -100.0)
        log_1mp = jnp.maximum(jnp.log(1.0 - pr), -100.0)
        bce_sum = jnp.sum(-(tg * log_p + (1.0 - tg) * log_1mp))
        out_ref[0, 0] = lambd * inv_n_bce * bce_sum

    # Streaming MSE: native-dtype load, in-kernel f32 upcast, sub, mul, then a
    # vreg-granular reduce (pure VALU adds) into an (8, 128) f32 accumulator.
    d = recon_ref[...].astype(jnp.float32) - input_ref[...].astype(jnp.float32)
    sq = d * d

    row_start = (p * tiles + t) * tm          # unclamped logical row offset

    @pl.when(row_start + tm <= rows)          # interior tile: no masking
    def _full():
        acc_ref[...] += jnp.sum(sq.reshape(tm // 8, 8, _LANES), axis=0)

    @pl.when(row_start + tm > rows)           # boundary / overhang tile: mask OOB rows
    def _masked():
        row = row_start + jax.lax.broadcasted_iota(jnp.int32, (tm, _LANES), 0)
        sq_m = jnp.where(row < rows, sq, 0.0)
        acc_ref[...] += jnp.sum(sq_m.reshape(tm // 8, 8, _LANES), axis=0)

    # Finalize this partial: one deferred sublane+lane reduce and one scale.
    @pl.when(t == last_t)
    def _finalize():
        out_ref[0, 0] += (1.0 - lambd) * inv_n_mse * jnp.sum(acc_ref[...])


def double_loss(pred, recon, _input, target, lambd=0.5,
                num_partials=None, block_rows=None, vmem_limit_bytes=None):
    """pred/target: (B, C) probabilities/labels; recon/_input: same total size."""
    assert recon.size == _input.size
    assert pred.shape == target.shape

    dflt_parts, dflt_rows, dflt_vmem = _chip_defaults()
    num_partials = dflt_parts if num_partials is None else int(num_partials)
    block_rows = dflt_rows if block_rows is None else int(block_rows)
    vmem_limit_bytes = dflt_vmem if vmem_limit_bytes is None else int(vmem_limit_bytes)
    block_rows = _round_up(max(block_rows, _MIN_ROWS), _MIN_ROWS)

    n_bce = int(pred.size)
    n_mse = int(recon.size)
    B, C = pred.shape

    recon_flat = recon.reshape(-1)
    input_flat = _input.reshape(-1)

    # Lane-dense (rows, 128) view.  When n_mse is a multiple of 128 (and at
    # least one 32x128 slab) this is a free reshape: no pad, no HBM copy.
    # Otherwise pad by < 128 elements (or up to a single tiny 32x128 slab);
    # zero padding contributes 0 to the sum and the divisor stays n_mse.
    padded = max(_round_up(n_mse, _LANES), _MIN_ROWS * _LANES)
    if padded != n_mse:
        recon_flat = jnp.pad(recon_flat, (0, padded - n_mse))
        input_flat = jnp.pad(input_flat, (0, padded - n_mse))
    rows = padded // _LANES
    recon2d = recon_flat.reshape(rows, _LANES)
    input2d = input_flat.reshape(rows, _LANES)

    # Tile geometry: tm is a multiple of 32 (legal min tile for f32/bf16/int8),
    # tm <= rows, and chosen so the (partials, tiles) grid over-covers `rows`
    # by at most ~one ragged tile.  Ragged coverage is handled in-kernel.
    n_parts = max(1, min(num_partials, rows // _MIN_ROWS))
    tm_cap = min(block_rows, (rows // _MIN_ROWS) * _MIN_ROWS)
    rows_per_part = pl.cdiv(rows, n_parts)
    tiles = pl.cdiv(rows_per_part, tm_cap)
    tm = min(tm_cap, _round_up(pl.cdiv(rows_per_part, tiles), _MIN_ROWS))
    nblocks = pl.cdiv(rows, tm)
    n_parts = min(n_parts, nblocks)
    max_blk = nblocks - 1                     # last block whose start is in-bounds

    kernel = functools.partial(
        _double_loss_kernel,
        lambd=float(lambd),
        inv_n_bce=1.0 / float(n_bce),
        inv_n_mse=1.0 / float(n_mse),
        rows=rows, tm=tm, tiles=tiles,
    )

    def slab_map(p_idx, t_idx):
        # Clamp so any "overhang" grid slot (possible when nblocks % n_parts != 0)
        # re-reads the last valid block instead of DMA-ing out of bounds; the
        # in-kernel row mask zeroes its contribution.
        blk = p_idx * tiles + t_idx
        return (jnp.minimum(blk, max_blk), 0)

    itemsize = jnp.dtype(recon2d.dtype).itemsize
    cost = pl.CostEstimate(
        flops=3 * n_mse + 8 * n_bce,
        transcendentals=2 * n_bce,
        bytes_accessed=2 * rows * _LANES * itemsize + 2 * n_bce * 4 + n_parts * 4,
    )

    partials = pl.pallas_call(
        kernel,
        out_shape=jax.ShapeDtypeStruct((n_parts, 1), jnp.float32),
        grid_spec=pltpu.PrefetchScalarGridSpec(
            num_scalar_prefetch=0,
            grid=(n_parts, tiles),
            in_specs=[
                pl.BlockSpec((B, C), lambda p_i, t_i: (0, 0)),   # pred (resident)
                pl.BlockSpec((B, C), lambda p_i, t_i: (0, 0)),   # target (resident)
                pl.BlockSpec((tm, _LANES), slab_map),            # recon slab tile
                pl.BlockSpec((tm, _LANES), slab_map),            # input slab tile
            ],
            out_specs=pl.BlockSpec((1, 1), lambda p_i, t_i: (p_i, 0),
                                   memory_space=pltpu.MemorySpace.SMEM),
            scratch_shapes=[pltpu.VMEM((8, _LANES), jnp.float32)],
        ),
        compiler_params=pltpu.CompilerParams(
            dimension_semantics=("parallel", "arbitrary"),
            vmem_limit_bytes=vmem_limit_bytes,
        ),
        cost_estimate=cost,
    )(pred, target, recon2d, input2d)

    # Combine the (at most num_partials) per-core partial losses.
    return jnp.sum(partials)


def _reference(pred, recon, _input, target, lambd=0.5):
    B = pred.shape[0]
    log_p = jnp.maximum(jnp.log(pred), -100.0)
    log_1mp = jnp.maximum(jnp.log(1.0 - pred), -100.0)
    bce = jnp.mean(-(target * log_p + (1.0 - target) * log_1mp))
    diff = recon.reshape(B, -1) - _input.reshape(B, -1)
    mse = jnp.mean(diff * diff)
    return lambd * bce + (1 - lambd) * mse


if __name__ == "__main__":
    key = jax.random.PRNGKey(0)
    k1, k2, k3, k4 = jax.random.split(key, 4)

    B, C = 2, 4            # classification head: (B, C) probabilities
    Cr, H, W = 4, 16, 16   # reconstruction head: NCHW

    pred = jax.nn.sigmoid(jax.random.normal(k1, (B, C), dtype=jnp.float32))
    target = (jax.random.uniform(k2, (B, C)) > 0.5).astype(jnp.float32)
    recon = jax.random.normal(k3, (B, Cr, H, W), dtype=jnp.float32)
    _input = jax.random.normal(k4, (B, Cr, H, W), dtype=jnp.float32)

    loss = double_loss(pred, recon, _input, target, lambd=0.5)
    jax.block_until_ready(loss)
    ref = _reference(pred, recon, _input, target, lambd=0.5)
    np.testing.assert_allclose(np.asarray(loss), np.asarray(ref), rtol=1e-5, atol=1e-6)

    # Size not a multiple of 128: exercises the bounded tiny-pad path.
    recon2 = jax.random.normal(k3, (B, 3, 7, 5), dtype=jnp.float32)
    input2 = jax.random.normal(k4, (B, 3, 7, 5), dtype=jnp.float32)
    loss2 = double_loss(pred, recon2, input2, target, lambd=0.3)
    jax.block_until_ready(loss2)
    ref2 = _reference(pred, recon2, input2, target, lambd=0.3)
    np.testing.assert_allclose(np.asarray(loss2), np.asarray(ref2), rtol=1e-5, atol=1e-6)

    # 128-divisible but tile-ragged size with 2 partials: exercises the
    # zero-copy reshape path, in-kernel boundary masking and the multi-partial grid.
    recon3 = jax.random.normal(k3, (B, 8, 40, 40), dtype=jnp.float32)
    input3 = jax.random.normal(k4, (B, 8, 40, 40), dtype=jnp.float32)
    loss3 = double_loss(pred, recon3, input3, target, lambd=0.5, num_partials=2)
    jax.block_until_ready(loss3)
    ref3 = _reference(pred, recon3, input3, target, lambd=0.5)
    np.testing.assert_allclose(np.asarray(loss3), np.asarray(ref3), rtol=1e-5, atol=1e-6)

    print("KERNEL_OK")
</pallas_src>

<mosaic_0001>
module attributes {stable_mosaic.version = 11 : i64} {
  func.func @_double_loss_kernel(%arg0: i32, %arg1: i32, %arg2: memref<2x4xf32, #tpu.memory_space<vmem>>, %arg3: memref<2x4xf32, #tpu.memory_space<vmem>>, %arg4: memref<32x128xf32, #tpu.memory_space<vmem>>, %arg5: memref<32x128xf32, #tpu.memory_space<vmem>>, %arg6: memref<1x1xf32, #tpu.memory_space<smem>>, %arg7: memref<8x128xf32, #tpu.memory_space<vmem>>) attributes {dimension_semantics = [#tpu.dimension_semantics<parallel>, #tpu.dimension_semantics<arbitrary>], iteration_bounds = array<i64: 1, 1>, scalar_prefetch = 0 : i64, scratch_operands = 1 : i64, tpu.core_type = #tpu.core_type<tc>, window_params = [{pipeline_mode = #tpu.pipeline_mode<synchronous>, transform_indices = @transform_0, window_bounds = array<i64: 2, 4>}, {pipeline_mode = #tpu.pipeline_mode<synchronous>, transform_indices = @transform_1, window_bounds = array<i64: 2, 4>}, {transform_indices = @transform_2, window_bounds = array<i64: 32, 128>}, {transform_indices = @transform_3, window_bounds = array<i64: 32, 128>}, {transform_indices = @transform_4, window_bounds = array<i64: 1, 1>}]} {
    %c0_i32 = arith.constant 0 : i32
    %0 = arith.cmpi eq, %arg1, %c0_i32 : i32
    %1 = arith.extui %0 : i1 to i32
    %c0_i32_0 = arith.constant 0 : i32
    %2 = arith.cmpi ne, %1, %c0_i32_0 : i32
    scf.if %2 {
      %cst = arith.constant 0.000000e+00 : f32
      %26 = vector.broadcast %cst : f32 to vector<8x128xf32>
      %c0_15 = arith.constant 0 : index
      %c0_16 = arith.constant 0 : index
      %27 = vector.load %arg7[%c0_15, %c0_16] : memref<8x128xf32, #tpu.memory_space<vmem>>, vector<8x128xf32>
      tpu.vector_store %arg7[%c0_15, %c0_16], %26 {strides = array<i32>} : memref<8x128xf32, #tpu.memory_space<vmem>>, vector<8x128xf32>,
      %cst_17 = arith.constant 0.000000e+00 : f32
      %c0_18 = arith.constant 0 : index
      %c0_19 = arith.constant 0 : index
      %28 = memref.load %arg6[%c0_18, %c0_19] : memref<1x1xf32, #tpu.memory_space<smem>>
      memref.store %cst_17, %arg6[%c0_18, %c0_19] : memref<1x1xf32, #tpu.memory_space<smem>>
    } else {
    }
    %c0_i32_1 = arith.constant 0 : i32
    %3 = arith.cmpi eq, %arg0, %c0_i32_1 : i32
    %c0_i32_2 = arith.constant 0 : i32
    %4 = arith.cmpi eq, %arg1, %c0_i32_2 : i32
    %5 = arith.andi %3, %4 : i1
    %6 = arith.extui %5 : i1 to i32
    %c0_i32_3 = arith.constant 0 : i32
    %7 = arith.cmpi ne, %6, %c0_i32_3 : i32
    scf.if %7 {
      %c0_15 = arith.constant 0 : index
      %c0_16 = arith.constant 0 : index
      %26 = vector.load %arg2[%c0_15, %c0_16] : memref<2x4xf32, #tpu.memory_space<vmem>>, vector<2x4xf32>
      %c0_17 = arith.constant 0 : index
      %c0_18 = arith.constant 0 : index
      %27 = vector.load %arg3[%c0_17, %c0_18] : memref<2x4xf32, #tpu.memory_space<vmem>>, vector<2x4xf32>
      %28 = math.log %26 : vector<2x4xf32>
      %cst = arith.constant -1.000000e+02 : f32
      %29 = vector.broadcast %cst : f32 to vector<2x4xf32>
      %30 = arith.maximumf %28, %29 : vector<2x4xf32>
      %cst_19 = arith.constant 1.000000e+00 : f32
      %31 = vector.broadcast %cst_19 : f32 to vector<2x4xf32>
      %32 = arith.subf %31, %26 : vector<2x4xf32>
      %33 = math.log %32 : vector<2x4xf32>
      %cst_20 = arith.constant -1.000000e+02 : f32
      %34 = vector.broadcast %cst_20 : f32 to vector<2x4xf32>
      %35 = arith.maximumf %33, %34 : vector<2x4xf32>
      %36 = arith.mulf %27, %30 : vector<2x4xf32>
      %cst_21 = arith.constant 1.000000e+00 : f32
      %37 = vector.broadcast %cst_21 : f32 to vector<2x4xf32>
      %38 = arith.subf %37, %27 : vector<2x4xf32>
      %39 = arith.mulf %38, %35 : vector<2x4xf32>
      %40 = arith.addf %36, %39 : vector<2x4xf32>
      %cst_22 = arith.constant 0.000000e+00 : f32
      %41 = vector.broadcast %cst_22 : f32 to vector<2x4xf32>
      %42 = arith.subf %41, %40 : vector<2x4xf32>
      %43 = vector.shape_cast %42 : vector<2x4xf32> to vector<1x2x4xf32>
      %cst_23 = arith.constant dense<0.000000e+00> : vector<1xf32>
      %44 = vector.multi_reduction <add>, %43, %cst_23 [1, 2] : vector<1x2x4xf32> to vector<1xf32>
      %45 = vector.shape_cast %44 : vector<1xf32> to vector<1x1x1xf32>
      %46 = vector.extract %45[0, 0, 0] : f32 from vector<1x1x1xf32>
      %cst_24 = arith.constant 6.250000e-02 : f32
      %47 = arith.mulf %cst_24, %46 : f32
      %c0_25 = arith.constant 0 : index
      %c0_26 = arith.constant 0 : index
      %48 = memref.load %arg6[%c0_25, %c0_26] : memref<1x1xf32, #tpu.memory_space<smem>>
      memref.store %47, %arg6[%c0_25, %c0_26] : memref<1x1xf32, #tpu.memory_space<smem>>
    } else {
    }
    %c0 = arith.constant 0 : index
    %c0_4 = arith.constant 0 : index
    %8 = vector.load %arg4[%c0, %c0_4] : memref<32x128xf32, #tpu.memory_space<vmem>>, vector<32x128xf32>
    %c0_5 = arith.constant 0 : index
    %c0_6 = arith.constant 0 : index
    %9 = vector.load %arg5[%c0_5, %c0_6] : memref<32x128xf32, #tpu.memory_space<vmem>>, vector<32x128xf32>
    %10 = arith.subf %8, %9 : vector<32x128xf32>
    %11 = arith.mulf %10, %10 : vector<32x128xf32>
    %c1_i32 = arith.constant 1 : i32
    %12 = arith.muli %arg0, %c1_i32 : i32
    %13 = arith.addi %12, %arg1 : i32
    %c32_i32 = arith.constant 32 : i32
    %14 = arith.muli %13, %c32_i32 : i32
    %c32_i32_7 = arith.constant 32 : i32
    %15 = arith.addi %14, %c32_i32_7 : i32
    %c32_i32_8 = arith.constant 32 : i32
    %16 = arith.cmpi sle, %15, %c32_i32_8 : i32
    %17 = arith.extui %16 : i1 to i32
    %c0_i32_9 = arith.constant 0 : i32
    %18 = arith.cmpi ne, %17, %c0_i32_9 : i32
    scf.if %18 {
      %c0_15 = arith.constant 0 : index
      %c0_16 = arith.constant 0 : index
      %26 = vector.load %arg7[%c0_15, %c0_16] : memref<8x128xf32, #tpu.memory_space<vmem>>, vector<8x128xf32>
      %27 = vector.shape_cast %11 : vector<32x128xf32> to vector<4x8x128xf32>
      %cst = arith.constant dense<0.000000e+00> : vector<8x128xf32>
      %28 = vector.multi_reduction <add>, %27, %cst [0] : vector<4x8x128xf32> to vector<8x128xf32>
      %29 = arith.addf %26, %28 : vector<8x128xf32>
      %c0_17 = arith.constant 0 : index
      %c0_18 = arith.constant 0 : index
      %30 = vector.load %arg7[%c0_17, %c0_18] : memref<8x128xf32, #tpu.memory_space<vmem>>, vector<8x128xf32>
      tpu.vector_store %arg7[%c0_17, %c0_18], %29 {strides = array<i32>} : memref<8x128xf32, #tpu.memory_space<vmem>>, vector<8x128xf32>,
    } else {
    }
    %c32_i32_10 = arith.constant 32 : i32
    %19 = arith.addi %14, %c32_i32_10 : i32
    %c32_i32_11 = arith.constant 32 : i32
    %20 = arith.cmpi sgt, %19, %c32_i32_11 : i32
    %21 = arith.extui %20 : i1 to i32
    %c0_i32_12 = arith.constant 0 : i32
    %22 = arith.cmpi ne, %21, %c0_i32_12 : i32
    scf.if %22 {
      %26 = tpu.iota {dimensions = array<i32: 0>} : vector<32x128xi32>
      %27 = vector.broadcast %14 : i32 to vector<32x128xi32>
      %28 = arith.addi %27, %26 : vector<32x128xi32>
      %c32_i32_15 = arith.constant 32 : i32
      %29 = vector.broadcast %c32_i32_15 : i32 to vector<32x128xi32>
      %30 = arith.cmpi slt, %28, %29 : vector<32x128xi32>
      %cst = arith.constant 0.000000e+00 : f32
      %31 = vector.broadcast %cst : f32 to vector<32x128xf32>
      %32 = arith.select %30, %11, %31 : vector<32x128xi1>, vector<32x128xf32>
      %c0_16 = arith.constant 0 : index
      %c0_17 = arith.constant 0 : index
      %33 = vector.load %arg7[%c0_16, %c0_17] : memref<8x128xf32, #tpu.memory_space<vmem>>, vector<8x128xf32>
      %34 = vector.shape_cast %32 : vector<32x128xf32> to vector<4x8x128xf32>
      %cst_18 = arith.constant dense<0.000000e+00> : vector<8x128xf32>
      %35 = vector.multi_reduction <add>, %34, %cst_18 [0] : vector<4x8x128xf32> to vector<8x128xf32>
      %36 = arith.addf %33, %35 : vector<8x128xf32>
      %c0_19 = arith.constant 0 : index
      %c0_20 = arith.constant 0 : index
      %37 = vector.load %arg7[%c0_19, %c0_20] : memref<8x128xf32, #tpu.memory_space<vmem>>, vector<8x128xf32>
      tpu.vector_store %arg7[%c0_19, %c0_20], %36 {strides = array<i32>} : memref<8x128xf32, #tpu.memory_space<vmem>>, vector<8x128xf32>,
    } else {
    }
    %c0_i32_13 = arith.constant 0 : i32
    %23 = arith.cmpi eq, %arg1, %c0_i32_13 : i32
    %24 = arith.extui %23 : i1 to i32
    %c0_i32_14 = arith.constant 0 : i32
    %25 = arith.cmpi ne, %24, %c0_i32_14 : i32
    scf.if %25 {
      %c0_15 = arith.constant 0 : index
      %c0_16 = arith.constant 0 : index
      %26 = memref.load %arg6[%c0_15, %c0_16] : memref<1x1xf32, #tpu.memory_space<smem>>
      %c0_17 = arith.constant 0 : index
      %c0_18 = arith.constant 0 : index
      %27 = vector.load %arg7[%c0_17, %c0_18] : memref<8x128xf32, #tpu.memory_space<vmem>>, vector<8x128xf32>
      %28 = vector.shape_cast %27 : vector<8x128xf32> to vector<1x8x128xf32>
      %cst = arith.constant dense<0.000000e+00> : vector<1xf32>
      %29 = vector.multi_reduction <add>, %28, %cst [1, 2] : vector<1x8x128xf32> to vector<1xf32>
      %30 = vector.shape_cast %29 : vector<1xf32> to vector<1x1x1xf32>
      %31 = vector.extract %30[0, 0, 0] : f32 from vector<1x1x1xf32>
      %cst_19 = arith.constant 2.44140625E-4 : f32
      %32 = arith.mulf %cst_19, %31 : f32
      %33 = arith.addf %26, %32 : f32
      %c0_20 = arith.constant 0 : index
      %c0_21 = arith.constant 0 : index
      %34 = memref.load %arg6[%c0_20, %c0_21] : memref<1x1xf32, #tpu.memory_space<smem>>
      memref.store %33, %arg6[%c0_20, %c0_21] : memref<1x1xf32, #tpu.memory_space<smem>>
    } else {
    }
    return
  }
  func.func @transform_0(%arg0: i32, %arg1: i32) -> (i32, i32) {
    %c0_i32 = arith.constant 0 : i32
    %c0_i32_0 = arith.constant 0 : i32
    %c0_i32_1 = arith.constant 0 : i32
    return %c0_i32, %c0_i32_0 : i32, i32
  }
  func.func @transform_1(%arg0: i32, %arg1: i32) -> (i32, i32) {
    %c0_i32 = arith.constant 0 : i32
    %c0_i32_0 = arith.constant 0 : i32
    %c0_i32_1 = arith.constant 0 : i32
    return %c0_i32, %c0_i32_0 : i32, i32
  }
  func.func @transform_2(%arg0: i32, %arg1: i32) -> (i32, i32) {
    %c1_i32 = arith.constant 1 : i32
    %0 = arith.muli %arg0, %c1_i32 : i32
    %1 = arith.addi %0, %arg1 : i32
    %c0_i32 = arith.constant 0 : i32
    %2 = arith.minsi %1, %c0_i32 : i32
    %c0_i32_0 = arith.constant 0 : i32
    %c0_i32_1 = arith.constant 0 : i32
    return %2, %c0_i32_0 : i32, i32
  }
  func.func @transform_3(%arg0: i32, %arg1: i32) -> (i32, i32) {
    %c1_i32 = arith.constant 1 : i32
    %0 = arith.muli %arg0, %c1_i32 : i32
    %1 = arith.addi %0, %arg1 : i32
    %c0_i32 = arith.constant 0 : i32
    %2 = arith.minsi %1, %c0_i32 : i32
    %c0_i32_0 = arith.constant 0 : i32
    %c0_i32_1 = arith.constant 0 : i32
    return %2, %c0_i32_0 : i32, i32
  }
  func.func @transform_4(%arg0: i32, %arg1: i32) -> (i32, i32) {
    %c0_i32 = arith.constant 0 : i32
    %c0_i32_0 = arith.constant 0 : i32
    return %arg0, %c0_i32 : i32, i32
  }
}

</mosaic_0001>

<llo_original>
// kernel: tpu_custom_call.1
$region0: #{tpu_custom_call.1}
  #allocation0 [shape = 'u32[]', space=smem, size = 0x4, offset = 0x4, fixed_abs, tag = 'smem constant byte address 0x4 - core index']
  #allocation1 [shape = 'u32[72,128]{1,0:T(1,128)}', space=vmem, size = 0x9000, scoped, tag = 'internal scratch']
  #allocation2 [shape = 'f32[8,128]{1,0:T(8,128)}', space=vmem, size = 0x1000, scoped, tag = 'scratch operand']
  %s0 = inlined_call_operand.hbm [shape: f32[2,4], index: 0, kind: input, shape index: {}]
  %s1 = inlined_call_operand.hbm [shape: f32[2,4], index: 1, kind: input, shape index: {}]
  %s2 = inlined_call_operand.hbm [shape: f32[32,128], index: 2, kind: input, shape index: {}]
  %s3 = inlined_call_operand.hbm [shape: f32[32,128], index: 3, kind: input, shape index: {}]
  %s4 = inlined_call_operand.hbm [shape: f32[1,1], index: 4, kind: output, shape index: {}]
  %s5 = sld [smem:[#allocation0]]
  $region62: #{tpu_custom_call.1} parent=0
    _
  %s7 = ssub.s32 1, %s5
  %s8 = scalar_select 0, %s7, %s5
  $region1: #{tpu_custom_call.1} parent=0
    #allocation3 [shape = 'u8[1024]{0}', space=vmem, size = 0x400, scoped, tag = 'input window, operand 0, single buffered']
    #allocation4 [shape = 's32[1]{0}', space=sflag, size = 0x4, scoped, tag = 'scoped memory for tpu_custom_call.1']
    #allocation5 [shape = 's32[1]{0}', space=sflag, size = 0x4, scoped, tag = 'scoped memory for tpu_custom_call.1']
    #allocation6 [shape = 'u8[1024]{0}', space=vmem, size = 0x400, scoped, tag = 'input window, operand 1, single buffered']
    #allocation7 [shape = 's32[1]{0}', space=sflag, size = 0x4, scoped, tag = 'scoped memory for tpu_custom_call.1']
    #allocation8 [shape = 'u8[16384]{0}', space=vmem, size = 0x4000, scoped, tag = 'input window, operand 2, single buffered']
    #allocation9 [shape = 'u8[16384]{0}', space=vmem, size = 0x4000, scoped, tag = 'input window, operand 3, single buffered']
    #allocation10 [shape = 's32[1]{0}', space=sflag, size = 0x4, scoped, tag = 'scoped memory for tpu_custom_call.1']
    #allocation11 [shape = 'u8[512]{0}', space=smem, size = 0x200, scoped, tag = 'output window, operand 0, single buffered']
    %9 = vsyncpa [#allocation4], 0
    %10 = vsyncpa [#allocation7], 0
    %11 = vsyncpa [#allocation10], 0
    %12 = vsyncpa [#allocation5], 0
    // Predicated region
    $region2: #{tpu_custom_call.1} parent=1 // pred_check
      _
    $region3: #{tpu_custom_call.1} parent=1 // pred_check_branch
      %14 = sbr.rel (0) target = $region5
    $region4: #{tpu_custom_call.1} parent=1 // pred_region
      %16 = vsyncadd [#allocation4], 0
      %s18 = sshll.u32 %s0, 4
      %s19 = int_to_ptr.hbm [resolvable:$true] %s18
      %s20 = sshll.u32 [#allocation3], 4
      %s21 = int_to_ptr.vmem [resolvable:$true] %s20
      %23 = dma.hbm_to_vmem [thread:$0]  %s19, 32, %s21, [#allocation4]
    $region5: #{tpu_custom_call.1} parent=1 // pred_fallthru
      _
    // Predicated region
    $region6: #{tpu_custom_call.1} parent=1 // pred_check
      _
    $region7: #{tpu_custom_call.1} parent=1 // pred_check_branch
      %25 = sbr.rel (0) target = $region9
    $region8: #{tpu_custom_call.1} parent=1 // pred_region
      %27 = vsyncadd [#allocation7], 0
      %s29 = sshll.u32 %s1, 4
      %s30 = int_to_ptr.hbm [resolvable:$true] %s29
      %s31 = sshll.u32 [#allocation6], 4
      %s32 = int_to_ptr.vmem [resolvable:$true] %s31
      %34 = dma.hbm_to_vmem [thread:$0]  %s30, 32, %s32, [#allocation7]
    $region9: #{tpu_custom_call.1} parent=1 // pred_fallthru
      _
    // Predicated region
    $region10: #{tpu_custom_call.1} parent=1 // pred_check
      _
    $region11: #{tpu_custom_call.1} parent=1 // pred_check_branch
      %36 = sbr.rel (0) target = $region13
    $region12: #{tpu_custom_call.1} parent=1 // pred_region
      %s37 = sadd.s32 0, 0
      %p38 = scmp.lt.s32.totalorder %s37, 0
      %s39 = scalar_select %p38, %s37, 0
      %s40 = smul.u32 4, %s39
      %42 = vsyncadd [#allocation7], 0
      %s43 = smul.addr %s40, 8
      %s44 = scalar_lea.hbm %s2, %s43
      %s45 = sshll.u32 %s44, 4
      %s46 = int_to_ptr.hbm [resolvable:$true] %s45
      %s47 = sshll.u32 [#allocation8], 4
      %s48 = int_to_ptr.vmem [resolvable:$true] %s47
      %53 = dma.hbm_to_vmem [thread:$0]  %s46, 512, %s48, [#allocation7], 128, 128, 8
    $region13: #{tpu_custom_call.1} parent=1 // pred_fallthru
      _
    // Predicated region
    $region14: #{tpu_custom_call.1} parent=1 // pred_check
      _
    $region15: #{tpu_custom_call.1} parent=1 // pred_check_branch
      %55 = sbr.rel (0) target = $region17
    $region16: #{tpu_custom_call.1} parent=1 // pred_region
      %s56 = sadd.s32 0, 0
      %p57 = scmp.lt.s32.totalorder %s56, 0
      %s58 = scalar_select %p57, %s56, 0
      %s59 = smul.u32 4, %s58
      %61 = vsyncadd [#allocation10], 0
      %s62 = smul.addr %s59, 8
      %s63 = scalar_lea.hbm %s3, %s62
      %s64 = sshll.u32 %s63, 4
      %s65 = int_to_ptr.hbm [resolvable:$true] %s64
      %s66 = sshll.u32 [#allocation9], 4
      %s67 = int_to_ptr.vmem [resolvable:$true] %s66
      %72 = dma.hbm_to_vmem [thread:$0]  %s65, 512, %s67, [#allocation10], 128, 128, 8
    $region17: #{tpu_custom_call.1} parent=1 // pred_fallthru
      _
    // Predicated region
    $region18: #{tpu_custom_call.1} parent=1 // pred_check
      _
    $region19: #{tpu_custom_call.1} parent=1 // pred_check_branch
      %74 = sbr.rel (0) target = $region21
    $region20: #{tpu_custom_call.1} parent=1 // pred_region
      %76 = dma.done [#allocation4], 32
    $region21: #{tpu_custom_call.1} parent=1 // pred_fallthru
      _
    // Predicated region
    $region22: #{tpu_custom_call.1} parent=1 // pred_check
      _
    $region23: #{tpu_custom_call.1} parent=1 // pred_check_branch
      %78 = sbr.rel (0) target = $region25
    $region24: #{tpu_custom_call.1} parent=1 // pred_region
      %80 = dma.done [#allocation7], 32
    $region25: #{tpu_custom_call.1} parent=1 // pred_fallthru
      _
    // Predicated region
    $region26: #{tpu_custom_call.1} parent=1 // pred_check
      _
    $region27: #{tpu_custom_call.1} parent=1 // pred_check_branch
      %82 = sbr.rel (0) target = $region29
    $region28: #{tpu_custom_call.1} parent=1 // pred_region
      %84 = dma.done [#allocation7], 512
    $region29: #{tpu_custom_call.1} parent=1 // pred_fallthru
      _
    // Predicated region
    $region30: #{tpu_custom_call.1} parent=1 // pred_check
      _
    $region31: #{tpu_custom_call.1} parent=1 // pred_check_branch
      %86 = sbr.rel (0) target = $region33
    $region32: #{tpu_custom_call.1} parent=1 // pred_region
      %88 = dma.done [#allocation10], 512
    $region33: #{tpu_custom_call.1} parent=1 // pred_fallthru
      _
    %s89 = sadd.s32 0, 0
    %p90 = scmp.lt.s32.totalorder %s89, 0
    %s91 = scalar_select %p90, %s89, 0
    %s92 = smul.u32 4, %s91
    %s93 = sadd.s32 0, 0
    %p94 = scmp.lt.s32.totalorder %s93, 0
    %s95 = scalar_select %p94, %s93, 0
    %s96 = smul.u32 4, %s95
    %p97 = scmp.eq.s32.totalorder 0, 0
    // Predicated region
    $region34: #{tpu_custom_call.1} parent=1 // pred_check
      %p98 = pneg %p97
    $region35: #{tpu_custom_call.1} parent=1 // pred_check_branch
      %100 = sbr.rel (%p98) target = $region37
    $region36: #{tpu_custom_call.1} parent=1 // pred_region
      %101 = vst [vmem:[#allocation2] sm:$0xff] 0.0
      %s102 = scalar_lea.smem [#allocation11], 0
      %103 = sst [smem:[%s102]] 0.0
    $region37: #{tpu_custom_call.1} parent=1 // pred_fallthru
      _
    %p104 = scmp.eq.s32.totalorder 0, 0
    %p105 = pnand %p104, %p97
    %p106 = pneg %p105
    // Predicated region
    $region38: #{tpu_custom_call.1} parent=1 // pred_check
      _
    $region39: #{tpu_custom_call.1} parent=1 // pred_check_branch
      %108 = sbr.rel (%p105) target = $region41
    $region40: #{tpu_custom_call.1} parent=1 // pred_region
      %v109 = vld [vmem:[#allocation3] sm:$0x3]
      %v110 = vld [vmem:[#allocation6] sm:$0x3]
      %v111 = vlog2.pop %v109
      %v112 = vmul.f32 %v111, 0.6931472
      %v113 = vmax.f32 %v112, -100.0
      %v114 = vsub.f32 1.0, %v109
      %v115 = vlog2.pop %v114
      %v116 = vmul.f32 %v115, 0.6931472
      %v117 = vmax.f32 %v116, -100.0
      %v118 = vmul.f32 %v110, %v113
      %v119 = vsub.f32 1.0, %v110
      %v120 = vmul.f32 %v119, %v117
      %v121 = vadd.f32 %v118, %v120
      %v122 = vsub.f32 0.0, %v121
      %vm123 = vcmask 25600
      %v124 = vsel %vm123, %v122, 0.0
      %125 = vadd.xlane.f32.xlu0 %v124
      %v126 = vpop.xlane.xlu0 %125
      %v127 = vrot.slane %v126, 4
      %v128 = vadd.f32 %v126, %v127
      %v129 = vrot.slane %v128, 2
      %v130 = vadd.f32 %v128, %v129
      %v131 = vrot.slane %v130, 1
      %v132 = vadd.f32 %v130, %v131
      %s133 = vtos %v132
      %s134 = smul.f32 %s133, 0.0625
      %s135 = scalar_lea.smem [#allocation11], 0
      %136 = sst [smem:[%s135]] %s134
    $region41: #{tpu_custom_call.1} parent=1 // pred_fallthru
      _
    %v137 = vld [vmem:[#allocation8] sm:$0xff]
    %v138 = vld [vmem:[#allocation8 + $0x8] sm:$0xff]
    %v139 = vld [vmem:[#allocation8 + $0x10] sm:$0xff]
    %v140 = vld [vmem:[#allocation8 + $0x18] sm:$0xff]
    %v141 = vld [vmem:[#allocation9] sm:$0xff]
    %v142 = vld [vmem:[#allocation9 + $0x8] sm:$0xff]
    %v143 = vld [vmem:[#allocation9 + $0x10] sm:$0xff]
    %v144 = vld [vmem:[#allocation9 + $0x18] sm:$0xff]
    %v145 = vsub.f32 %v137, %v141
    %v146 = vsub.f32 %v138, %v142
    %v147 = vsub.f32 %v139, %v143
    %v148 = vsub.f32 %v140, %v144
    %v149 = vmul.f32 %v145, %v145
    %v150 = vmul.f32 %v146, %v146
    %v151 = vmul.f32 %v147, %v147
    %v152 = vmul.f32 %v148, %v148
    %s153 = sadd.s32 0, 0
    %s154 = smul.u32 %s153, 32
    %s155 = sadd.s32 %s154, 32
    %p156 = scmp.le.s32.totalorder %s155, 32
    // Predicated region
    $region42: #{tpu_custom_call.1} parent=1 // pred_check
      %p157 = pneg %p156
    $region43: #{tpu_custom_call.1} parent=1 // pred_check_branch
      %159 = sbr.rel (%p157) target = $region45
    $region44: #{tpu_custom_call.1} parent=1 // pred_region
      %v160 = vld [vmem:[#allocation2] sm:$0xff]
      %v161 = vadd.f32 %v149, %v150
      %v162 = vadd.f32 %v161, %v151
      %v163 = vadd.f32 %v162, %v152
      %v164 = vadd.f32 %v160, %v163
      %165 = vst [vmem:[#allocation2] sm:$0xff] %v164
    $region45: #{tpu_custom_call.1} parent=1 // pred_fallthru
      _
    %p166 = scmp.gt.s32.totalorder %s155, 32
    // Predicated region
    $region46: #{tpu_custom_call.1} parent=1 // pred_check
      %p167 = pneg %p166
    $region47: #{tpu_custom_call.1} parent=1 // pred_check_branch
      %169 = sbr.rel (%p167) target = $region49
    $region48: #{tpu_custom_call.1} parent=1 // pred_region
      %v170 = vlaneseq
      %v171 = vshrl.u32 %v170, 7
      %v172 = vadd.s32 %v171, 8
      %v173 = vadd.s32 %v171, 16
      %v174 = vadd.s32 %v171, 24
      %v175 = vstv %s154
      %v176 = vadd.s32 %v175, %v171
      %v177 = vadd.s32 %v175, %v172
      %v178 = vadd.s32 %v175, %v173
      %v179 = vadd.s32 %v175, %v174
      %vm180 = vcmp.lt.s32.totalorder %v176, 32
      %vm181 = vcmp.lt.s32.totalorder %v177, 32
      %vm182 = vcmp.lt.s32.totalorder %v178, 32
      %vm183 = vcmp.lt.s32.totalorder %v179, 32
      %v184 = vsel %vm180, %v149, 0.0
      %v185 = vsel %vm181, %v150, 0.0
      %v186 = vsel %vm182, %v151, 0.0
      %v187 = vsel %vm183, %v152, 0.0
      %v188 = vld [vmem:[#allocation2] sm:$0xff]
      %v189 = vadd.f32 %v184, %v185
      %v190 = vadd.f32 %v189, %v186
      %v191 = vadd.f32 %v190, %v187
      %v192 = vadd.f32 %v188, %v191
      %193 = vst [vmem:[#allocation2] sm:$0xff] %v192
    $region49: #{tpu_custom_call.1} parent=1 // pred_fallthru
      _
    // Predicated region
    $region50: #{tpu_custom_call.1} parent=1 // pred_check
      %p194 = pneg %p97
    $region51: #{tpu_custom_call.1} parent=1 // pred_check_branch
      %196 = sbr.rel (%p194) target = $region53
    $region52: #{tpu_custom_call.1} parent=1 // pred_region
      %s197 = sld [smem:[#allocation11]]
      %v198 = vld [vmem:[#allocation2] sm:$0xff]
      %199 = vadd.xlane.f32.xlu0 %v198
      %v200 = vpop.xlane.xlu0 %199
      %v201 = vrot.slane %v200, 4
      %v202 = vadd.f32 %v200, %v201
      %v203 = vrot.slane %v202, 2
      %v204 = vadd.f32 %v202, %v203
      %v205 = vrot.slane %v204, 1
      %v206 = vadd.f32 %v204, %v205
      %s207 = vtos %v206
      %s208 = smul.f32 %s207, 0.00024414063
      %s209 = sadd.f32 %s197, %s208
      %s210 = scalar_lea.smem [#allocation11], 0
      %211 = sst [smem:[%s210]] %s209
    $region53: #{tpu_custom_call.1} parent=1 // pred_fallthru
      _
    // Predicated region
    $region54: #{tpu_custom_call.1} parent=1 // pred_check
      _
    $region55: #{tpu_custom_call.1} parent=1 // pred_check_branch
      %213 = sbr.rel (0) target = $region57
    $region56: #{tpu_custom_call.1} parent=1 // pred_region
      %215 = vsyncadd [#allocation5], 0
      %s217 = sshll.u32 %s4, 4
      %s218 = int_to_ptr.hbm [resolvable:$true] %s217
      %220 = dma.smem_to_hbm [#allocation11], 16, %s218, [#allocation5]
    $region57: #{tpu_custom_call.1} parent=1 // pred_fallthru
      _
    // Predicated region
    $region58: #{tpu_custom_call.1} parent=1 // pred_check
      _
    $region59: #{tpu_custom_call.1} parent=1 // pred_check_branch
      %222 = sbr.rel (0) target = $region61
    $region60: #{tpu_custom_call.1} parent=1 // pred_region
      %224 = dma.done [#allocation5], 16
    $region61: #{tpu_custom_call.1} parent=1 // pred_fallthru
      _
    %225 = sfence
    %226 = vsyncpa [#allocation4], 1
    %227 = vsyncpa [#allocation7], 1
    %228 = vsyncpa [#allocation10], 1
    %229 = vsyncpa [#allocation5], 1

</llo_original>
